<compile_context>
chip_gen: v5e
topology: v5e:2x2
jax: 0.10.0
libtpu: 0.0.40
codegen_flags: <defaults>
</compile_context>

<pallas_src>
import functools

import jax
import jax.numpy as jnp
from jax.experimental import pallas as pl
from jax.experimental.pallas import tpu as pltpu


def _round_up(x, m):
    return (x + m - 1) // m * m


# ---------------------------------------------------------------------------
# Pallas kernel: complex mode-wise contraction over input channels.
# ---------------------------------------------------------------------------

def _spectral_mul_kernel(x_ref, w_ref, o_ref):
    """One lane-dense mode tile of out[b,o,m] = sum_i x[b,i,m] * w[i,o,m].

    x_ref: (Cip, 2, B,  tM)   stacked (real, imag) spectral activations
    w_ref: (Cip, 2, Cop, tM)  stacked (real, imag) spectral weights
    o_ref: (2,  B, Cop, tM)   stacked (real, imag) output

    Accumulates over the in-channel axis with a (B, Cop, tM) f32 accumulator
    and a 3-multiply (Karatsuba) complex product.
    """
    cip = x_ref.shape[0]
    b = x_ref.shape[2]
    cop = w_ref.shape[2]
    tm = x_ref.shape[3]

    def body(i, acc):
        acc_r, acc_i = acc
        x_i = x_ref[i]                      # (2, B, tM)   dynamic leading index
        w_i = w_ref[i]                      # (2, Cop, tM)
        xr, xi = x_i[0], x_i[1]             # (B, tM)
        wr, wi = w_i[0], w_i[1]             # (Cop, tM)
        # (xr + j xi) * (wr + j wi) with 3 multiplies:
        #   t  = (xr + xi) * wr
        #   re = t - xi * (wr + wi)
        #   im = t + xr * (wi - wr)
        # The weight sums are formed once per (i, tile) and reused across B.
        ws = wr + wi
        wd = wi - wr
        t = (xr + xi)[:, None, :] * wr[None, :, :]              # (B, Cop, tM)
        acc_r = acc_r + (t - xi[:, None, :] * ws[None, :, :])
        acc_i = acc_i + (t + xr[:, None, :] * wd[None, :, :])
        return acc_r, acc_i

    zero = jnp.zeros((b, cop, tm), jnp.float32)
    acc_r, acc_i = jax.lax.fori_loop(0, cip, body, (zero, zero), unroll=True)
    o_ref[0] = acc_r
    o_ref[1] = acc_i


def _spectral_mul(x_stk, w_stk, *, tile_m):
    """x_stk: (Cip, 2, B, Mp), w_stk: (Cip, 2, Cop, Mp) -> (2, B, Cop, Mp)."""
    cip, _, b, mp = x_stk.shape
    cop = w_stk.shape[2]
    assert mp % tile_m == 0
    grid = (mp // tile_m,)
    return pl.pallas_call(
        _spectral_mul_kernel,
        out_shape=jax.ShapeDtypeStruct((2, b, cop, mp), jnp.float32),
        grid=grid,
        in_specs=[
            pl.BlockSpec((cip, 2, b, tile_m), lambda m: (0, 0, 0, m)),
            pl.BlockSpec((cip, 2, cop, tile_m), lambda m: (0, 0, 0, m)),
        ],
        out_specs=pl.BlockSpec((2, b, cop, tile_m), lambda m: (0, 0, 0, m)),
        compiler_params=pltpu.CompilerParams(
            # Mode tiles are independent -> shard across v7x's 2 TensorCores.
            dimension_semantics=("parallel",),
            # Explicit scoped-VMEM budget with headroom (v7x has 64 MiB total).
            vmem_limit_bytes=48 * 1024 * 1024,
        ),
    )(x_stk, w_stk)


# ---------------------------------------------------------------------------
# SpectralConv2d forward (Pallas hot path) and its pure-JAX reference.
# ---------------------------------------------------------------------------

def spectral_conv2d_pallas(x, w1r, w1i, w2r, w2i, *, modes1, modes2):
    """SpectralConv2d.forward with the mode contraction done in Pallas.

    x: (B, Ci, H, W) float32.  w*: (Ci, Co, modes1, modes2) float32 (re / im).
    """
    B, Ci, H, W = x.shape
    Co = w1r.shape[1]
    Wf = W // 2 + 1
    M = modes1 * modes2

    x_ft = jnp.fft.rfft2(x)                                     # (B, Ci, H, Wf) c64

    # Fuse the two retained frequency corners along the flattened mode axis.
    lo = x_ft[:, :, :modes1, :modes2].reshape(B, Ci, M)
    hi = x_ft[:, :, H - modes1:, :modes2].reshape(B, Ci, M)
    xm = jnp.concatenate([lo, hi], axis=-1)                     # (B, Ci, 2M)
    wm_r = jnp.concatenate([w1r.reshape(Ci, Co, M), w2r.reshape(Ci, Co, M)], axis=-1)
    wm_i = jnp.concatenate([w1i.reshape(Ci, Co, M), w2i.reshape(Ci, Co, M)], axis=-1)

    M2 = 2 * M
    Cip = _round_up(Ci, 8)                       # sublane-aligned channels
    Cop = _round_up(Co, 8)
    tile_m = min(512, _round_up(M2, 128))        # lane-dense tiles, v7x-friendly
    Mp = _round_up(M2, tile_m)

    # Stack real/imag into a single array per operand (halves the DMA streams)
    # and put the contraction axis (Ci) leading for direct per-i indexing.
    x_stk = jnp.stack([jnp.real(xm), jnp.imag(xm)], axis=0).astype(jnp.float32)
    x_stk = jnp.transpose(x_stk, (2, 0, 1, 3))                  # (Ci, 2, B, 2M)
    x_stk = jnp.pad(x_stk, ((0, Cip - Ci), (0, 0), (0, 0), (0, Mp - M2)))

    w_stk = jnp.stack([wm_r, wm_i], axis=0).astype(jnp.float32)
    w_stk = jnp.transpose(w_stk, (1, 0, 2, 3))                  # (Ci, 2, Co, 2M)
    w_stk = jnp.pad(w_stk, ((0, Cip - Ci), (0, 0), (0, Cop - Co), (0, Mp - M2)))

    out = _spectral_mul(x_stk, w_stk, tile_m=tile_m)            # (2, B, Cop, Mp)
    out = out[:, :, :Co, :M2]
    o_c = (out[0] + 1j * out[1]).astype(jnp.complex64)          # (B, Co, 2M)
    o_lo = o_c[:, :, :M].reshape(B, Co, modes1, modes2)
    o_hi = o_c[:, :, M:].reshape(B, Co, modes1, modes2)

    out_ft = jnp.zeros((B, Co, H, Wf), dtype=jnp.complex64)
    out_ft = out_ft.at[:, :, :modes1, :modes2].set(o_lo)
    out_ft = out_ft.at[:, :, H - modes1:, :modes2].set(o_hi)
    return jnp.fft.irfft2(out_ft, s=(H, W))                     # (B, Co, H, W) f32


def spectral_conv2d_reference(x, w1r, w1i, w2r, w2i, *, modes1, modes2):
    """Pure-JAX mirror of the PyTorch SpectralConv2d.forward (no Pallas)."""
    B, Ci, H, W = x.shape
    Co = w1r.shape[1]
    Wf = W // 2 + 1
    hp = jax.lax.Precision.HIGHEST
    x_ft = jnp.fft.rfft2(x)
    w1 = (w1r + 1j * w1i).astype(jnp.complex64)
    w2 = (w2r + 1j * w2i).astype(jnp.complex64)
    out_ft = jnp.zeros((B, Co, H, Wf), dtype=jnp.complex64)
    out_ft = out_ft.at[:, :, :modes1, :modes2].set(
        jnp.einsum('bixy,ioxy->boxy', x_ft[:, :, :modes1, :modes2], w1, precision=hp))
    out_ft = out_ft.at[:, :, H - modes1:, :modes2].set(
        jnp.einsum('bixy,ioxy->boxy', x_ft[:, :, H - modes1:, :modes2], w2, precision=hp))
    return jnp.fft.irfft2(out_ft, s=(H, W))


# ---------------------------------------------------------------------------
# FNO2d forward (shared plumbing; only the spectral layers switch paths).
# ---------------------------------------------------------------------------

def _gelu(x):
    return jax.nn.gelu(x, approximate=False)      # torch F.gelu default (erf form)


def _conv1x1(x, w, b):
    """1x1 Conv2d: x (B, Cin, H, W), w (Cout, Cin), b (Cout,)."""
    y = jnp.einsum('bihw,oi->bohw', x, w, precision=jax.lax.Precision.HIGHEST)
    return y + b[None, :, None, None]


def _linear(x, w, b):
    """nn.Linear on the last axis: x (..., Cin), w (Cout, Cin), b (Cout,)."""
    return jnp.einsum('...i,oi->...o', x, w, precision=jax.lax.Precision.HIGHEST) + b


def _mlp(x, p):
    return _conv1x1(_gelu(_conv1x1(x, p['w1'], p['b1'])), p['w2'], p['b2'])


def _get_grid(batch, size_x, size_y):
    gx = jnp.linspace(0.0, 1.0, size_x, dtype=jnp.float32).reshape(1, size_x, 1, 1)
    gx = jnp.broadcast_to(gx, (batch, size_x, size_y, 1))
    gy = jnp.linspace(0.0, 1.0, size_y, dtype=jnp.float32).reshape(1, 1, size_y, 1)
    gy = jnp.broadcast_to(gy, (batch, size_x, size_y, 1))
    return jnp.concatenate([gx, gy], axis=-1)


@functools.partial(jax.jit, static_argnames=('modes1', 'modes2', 'padding', 'use_pallas'))
def fno2d_forward(x, params, *, modes1, modes2, padding, use_pallas):
    """FNO2d.forward.  x: (B, 1, s, s) -> (B, s, s, 1).

    use_pallas=True : spectral layers use the Pallas kernel.
    use_pallas=False: pure-JAX reference spectral layers (everything else shared).
    """
    spectral = spectral_conv2d_pallas if use_pallas else spectral_conv2d_reference

    B = x.shape[0]
    x = jnp.transpose(x, (0, 2, 3, 1))                       # b c m n -> b m n c
    sx, sy = x.shape[1], x.shape[2]
    x = jnp.concatenate([x, _get_grid(B, sx, sy)], axis=-1)  # (B, s, s, 3)
    x = _linear(x, params['p']['w'], params['p']['b'])       # (B, s, s, width)
    x = jnp.transpose(x, (0, 3, 1, 2))                       # (B, width, s, s)
    x = jnp.pad(x, ((0, 0), (0, 0), (0, padding), (0, padding)))

    for li in range(4):
        c = params[f'conv{li}']
        x1 = spectral(x, c['w1r'], c['w1i'], c['w2r'], c['w2i'],
                      modes1=modes1, modes2=modes2)
        x1 = _mlp(x1, params[f'mlp{li}'])
        x2 = _conv1x1(x, params[f'w{li}']['w'], params[f'w{li}']['b'])
        x = x1 + x2
        if li != 3:
            x = _gelu(x)

    x = x[..., :-padding, :-padding]
    x = _mlp(x, params['q'])                                 # (B, 1, s, s)
    return jnp.transpose(x, (0, 2, 3, 1))                    # (B, s, s, 1)


def init_params(key, width, modes1, modes2):
    keys = iter(jax.random.split(key, 64))

    def dense(cin, cout):
        k = 1.0 / (cin ** 0.5)
        return {'w': jax.random.uniform(next(keys), (cout, cin), jnp.float32, -k, k),
                'b': jax.random.uniform(next(keys), (cout,), jnp.float32, -k, k)}

    def mlp_p(cin, cout, cmid):
        a, c = dense(cin, cmid), dense(cmid, cout)
        return {'w1': a['w'], 'b1': a['b'], 'w2': c['w'], 'b2': c['b']}

    def spectral_p(cin, cout):
        scale = 1.0 / (cin * cout)
        shape = (cin, cout, modes1, modes2)
        # torch.rand(..., dtype=cfloat): uniform [0,1) real and imag parts.
        return {'w1r': scale * jax.random.uniform(next(keys), shape, jnp.float32),
                'w1i': scale * jax.random.uniform(next(keys), shape, jnp.float32),
                'w2r': scale * jax.random.uniform(next(keys), shape, jnp.float32),
                'w2i': scale * jax.random.uniform(next(keys), shape, jnp.float32)}

    params = {'p': dense(3, width)}
    for li in range(4):
        params[f'conv{li}'] = spectral_p(width, width)
        params[f'mlp{li}'] = mlp_p(width, width, width)
        params[f'w{li}'] = dense(width, width)
    params['q'] = mlp_p(width, 1, width * 4)
    return params


if __name__ == "__main__":
    B, S = 2, 16
    width = 32
    modes1 = modes2 = 6
    padding = 9

    root = jax.random.PRNGKey(0)
    k_sc, k_x, k_p = jax.random.split(root, 3)

    # ---- 1) Standalone SpectralConv2d check (tight tolerance, small shapes) ----
    Ci = Co = 4
    m1 = m2 = 4
    scale = 1.0 / (Ci * Co)
    ks = jax.random.split(k_sc, 5)
    xs = jax.random.normal(ks[0], (B, Ci, S, S), dtype=jnp.float32)
    w1r = scale * jax.random.uniform(ks[1], (Ci, Co, m1, m2), dtype=jnp.float32)
    w1i = scale * jax.random.uniform(ks[2], (Ci, Co, m1, m2), dtype=jnp.float32)
    w2r = scale * jax.random.uniform(ks[3], (Ci, Co, m1, m2), dtype=jnp.float32)
    w2i = scale * jax.random.uniform(ks[4], (Ci, Co, m1, m2), dtype=jnp.float32)

    sc_fn = jax.jit(functools.partial(spectral_conv2d_pallas, modes1=m1, modes2=m2))
    sc_out = jax.block_until_ready(sc_fn(xs, w1r, w1i, w2r, w2i))
    sc_ref = jax.block_until_ready(
        spectral_conv2d_reference(xs, w1r, w1i, w2r, w2i, modes1=m1, modes2=m2))
    assert sc_out.shape == (B, Co, S, S), sc_out.shape
    assert jnp.allclose(sc_out, sc_ref, rtol=1e-4, atol=3e-5), \
        float(jnp.max(jnp.abs(sc_out - sc_ref)))

    # ---- 2) Full FNO2d forward: Pallas spectral layers vs pure-JAX reference ----
    x = jax.random.normal(k_x, (B, 1, S, S), dtype=jnp.float32)
    params = init_params(k_p, width, modes1, modes2)

    out = fno2d_forward(x, params, modes1=modes1, modes2=modes2,
                        padding=padding, use_pallas=True)
    ref = fno2d_forward(x, params, modes1=modes1, modes2=modes2,
                        padding=padding, use_pallas=False)
    out, ref = jax.block_until_ready((out, ref))

    assert out.shape == (B, S, S, 1), out.shape
    assert jnp.allclose(out, ref, rtol=1e-3, atol=1e-4), \
        float(jnp.max(jnp.abs(out - ref)))

    print("KERNEL_OK")
</pallas_src>

<mosaic_0001>
module attributes {stable_mosaic.version = 11 : i64} {
  func.func @_spectral_mul_kernel(%arg0: i32, %arg1: memref<8x2x2x128xf32, #tpu.memory_space<vmem>>, %arg2: memref<8x2x8x128xf32, #tpu.memory_space<vmem>>, %arg3: memref<2x2x8x128xf32, #tpu.memory_space<vmem>>) attributes {dimension_semantics = [#tpu.dimension_semantics<parallel>], iteration_bounds = array<i64: 1>, scalar_prefetch = 0 : i64, scratch_operands = 0 : i64, tpu.core_type = #tpu.core_type<tc>, window_params = [{transform_indices = @transform_0, window_bounds = array<i64: 8, 2, 2, 128>}, {transform_indices = @transform_1, window_bounds = array<i64: 8, 2, 8, 128>}, {transform_indices = @transform_2, window_bounds = array<i64: 2, 2, 8, 128>}]} {
    %cst = arith.constant 0.000000e+00 : f32
    %0 = vector.broadcast %cst : f32 to vector<2x8x128xf32>
    %c0_i32 = arith.constant 0 : i32
    %1 = arith.index_cast %c0_i32 : i32 to index
    %c0 = arith.constant 0 : index
    %c0_0 = arith.constant 0 : index
    %c0_1 = arith.constant 0 : index
    %2 = vector.load %arg1[%1, %c0, %c0_0, %c0_1] : memref<8x2x2x128xf32, #tpu.memory_space<vmem>>, vector<1x2x2x128xf32>
    %3 = vector.shape_cast %2 : vector<1x2x2x128xf32> to vector<2x2x128xf32>
    %4 = arith.index_cast %c0_i32 : i32 to index
    %c0_2 = arith.constant 0 : index
    %c0_3 = arith.constant 0 : index
    %c0_4 = arith.constant 0 : index
    %5 = vector.load %arg2[%4, %c0_2, %c0_3, %c0_4] : memref<8x2x8x128xf32, #tpu.memory_space<vmem>>, vector<1x2x8x128xf32>
    %6 = vector.shape_cast %5 : vector<1x2x8x128xf32> to vector<2x8x128xf32>
    %7 = vector.extract_strided_slice %3 {offsets = [0, 0, 0], sizes = [1, 2, 128], strides = [1, 1, 1]} : vector<2x2x128xf32> to vector<1x2x128xf32>
    %8 = vector.shape_cast %7 : vector<1x2x128xf32> to vector<2x128xf32>
    %9 = vector.extract_strided_slice %3 {offsets = [1, 0, 0], sizes = [1, 2, 128], strides = [1, 1, 1]} : vector<2x2x128xf32> to vector<1x2x128xf32>
    %10 = vector.shape_cast %9 : vector<1x2x128xf32> to vector<2x128xf32>
    %11 = vector.extract_strided_slice %6 {offsets = [0, 0, 0], sizes = [1, 8, 128], strides = [1, 1, 1]} : vector<2x8x128xf32> to vector<1x8x128xf32>
    %12 = vector.shape_cast %11 : vector<1x8x128xf32> to vector<8x128xf32>
    %13 = vector.extract_strided_slice %6 {offsets = [1, 0, 0], sizes = [1, 8, 128], strides = [1, 1, 1]} : vector<2x8x128xf32> to vector<1x8x128xf32>
    %14 = vector.shape_cast %13 : vector<1x8x128xf32> to vector<8x128xf32>
    %15 = arith.addf %12, %14 : vector<8x128xf32>
    %16 = arith.subf %14, %12 : vector<8x128xf32>
    %17 = arith.addf %8, %10 : vector<2x128xf32>
    %18 = vector.shape_cast %17 : vector<2x128xf32> to vector<2x1x128xf32>
    %19 = vector.shape_cast %12 : vector<8x128xf32> to vector<1x8x128xf32>
    %20 = vector.broadcast %18 : vector<2x1x128xf32> to vector<2x8x128xf32>
    %21 = vector.broadcast %19 : vector<1x8x128xf32> to vector<2x8x128xf32>
    %22 = arith.mulf %20, %21 : vector<2x8x128xf32>
    %23 = vector.shape_cast %10 : vector<2x128xf32> to vector<2x1x128xf32>
    %24 = vector.shape_cast %15 : vector<8x128xf32> to vector<1x8x128xf32>
    %25 = vector.broadcast %23 : vector<2x1x128xf32> to vector<2x8x128xf32>
    %26 = vector.broadcast %24 : vector<1x8x128xf32> to vector<2x8x128xf32>
    %27 = arith.mulf %25, %26 : vector<2x8x128xf32>
    %28 = arith.subf %22, %27 : vector<2x8x128xf32>
    %29 = arith.addf %0, %28 : vector<2x8x128xf32>
    %30 = vector.shape_cast %8 : vector<2x128xf32> to vector<2x1x128xf32>
    %31 = vector.shape_cast %16 : vector<8x128xf32> to vector<1x8x128xf32>
    %32 = vector.broadcast %30 : vector<2x1x128xf32> to vector<2x8x128xf32>
    %33 = vector.broadcast %31 : vector<1x8x128xf32> to vector<2x8x128xf32>
    %34 = arith.mulf %32, %33 : vector<2x8x128xf32>
    %35 = arith.addf %22, %34 : vector<2x8x128xf32>
    %36 = arith.addf %0, %35 : vector<2x8x128xf32>
    %c1_i32 = arith.constant 1 : i32
    %37 = arith.index_cast %c1_i32 : i32 to index
    %c0_5 = arith.constant 0 : index
    %c0_6 = arith.constant 0 : index
    %c0_7 = arith.constant 0 : index
    %38 = vector.load %arg1[%37, %c0_5, %c0_6, %c0_7] : memref<8x2x2x128xf32, #tpu.memory_space<vmem>>, vector<1x2x2x128xf32>
    %39 = vector.shape_cast %38 : vector<1x2x2x128xf32> to vector<2x2x128xf32>
    %40 = arith.index_cast %c1_i32 : i32 to index
    %c0_8 = arith.constant 0 : index
    %c0_9 = arith.constant 0 : index
    %c0_10 = arith.constant 0 : index
    %41 = vector.load %arg2[%40, %c0_8, %c0_9, %c0_10] : memref<8x2x8x128xf32, #tpu.memory_space<vmem>>, vector<1x2x8x128xf32>
    %42 = vector.shape_cast %41 : vector<1x2x8x128xf32> to vector<2x8x128xf32>
    %43 = vector.extract_strided_slice %39 {offsets = [0, 0, 0], sizes = [1, 2, 128], strides = [1, 1, 1]} : vector<2x2x128xf32> to vector<1x2x128xf32>
    %44 = vector.shape_cast %43 : vector<1x2x128xf32> to vector<2x128xf32>
    %45 = vector.extract_strided_slice %39 {offsets = [1, 0, 0], sizes = [1, 2, 128], strides = [1, 1, 1]} : vector<2x2x128xf32> to vector<1x2x128xf32>
    %46 = vector.shape_cast %45 : vector<1x2x128xf32> to vector<2x128xf32>
    %47 = vector.extract_strided_slice %42 {offsets = [0, 0, 0], sizes = [1, 8, 128], strides = [1, 1, 1]} : vector<2x8x128xf32> to vector<1x8x128xf32>
    %48 = vector.shape_cast %47 : vector<1x8x128xf32> to vector<8x128xf32>
    %49 = vector.extract_strided_slice %42 {offsets = [1, 0, 0], sizes = [1, 8, 128], strides = [1, 1, 1]} : vector<2x8x128xf32> to vector<1x8x128xf32>
    %50 = vector.shape_cast %49 : vector<1x8x128xf32> to vector<8x128xf32>
    %51 = arith.addf %48, %50 : vector<8x128xf32>
    %52 = arith.subf %50, %48 : vector<8x128xf32>
    %53 = arith.addf %44, %46 : vector<2x128xf32>
    %54 = vector.shape_cast %53 : vector<2x128xf32> to vector<2x1x128xf32>
    %55 = vector.shape_cast %48 : vector<8x128xf32> to vector<1x8x128xf32>
    %56 = vector.broadcast %54 : vector<2x1x128xf32> to vector<2x8x128xf32>
    %57 = vector.broadcast %55 : vector<1x8x128xf32> to vector<2x8x128xf32>
    %58 = arith.mulf %56, %57 : vector<2x8x128xf32>
    %59 = vector.shape_cast %46 : vector<2x128xf32> to vector<2x1x128xf32>
    %60 = vector.shape_cast %51 : vector<8x128xf32> to vector<1x8x128xf32>
    %61 = vector.broadcast %59 : vector<2x1x128xf32> to vector<2x8x128xf32>
    %62 = vector.broadcast %60 : vector<1x8x128xf32> to vector<2x8x128xf32>
    %63 = arith.mulf %61, %62 : vector<2x8x128xf32>
    %64 = arith.subf %58, %63 : vector<2x8x128xf32>
    %65 = arith.addf %29, %64 : vector<2x8x128xf32>
    %66 = vector.shape_cast %44 : vector<2x128xf32> to vector<2x1x128xf32>
    %67 = vector.shape_cast %52 : vector<8x128xf32> to vector<1x8x128xf32>
    %68 = vector.broadcast %66 : vector<2x1x128xf32> to vector<2x8x128xf32>
    %69 = vector.broadcast %67 : vector<1x8x128xf32> to vector<2x8x128xf32>
    %70 = arith.mulf %68, %69 : vector<2x8x128xf32>
    %71 = arith.addf %58, %70 : vector<2x8x128xf32>
    %72 = arith.addf %36, %71 : vector<2x8x128xf32>
    %c2_i32 = arith.constant 2 : i32
    %73 = arith.index_cast %c2_i32 : i32 to index
    %c0_11 = arith.constant 0 : index
    %c0_12 = arith.constant 0 : index
    %c0_13 = arith.constant 0 : index
    %74 = vector.load %arg1[%73, %c0_11, %c0_12, %c0_13] : memref<8x2x2x128xf32, #tpu.memory_space<vmem>>, vector<1x2x2x128xf32>
    %75 = vector.shape_cast %74 : vector<1x2x2x128xf32> to vector<2x2x128xf32>
    %76 = arith.index_cast %c2_i32 : i32 to index
    %c0_14 = arith.constant 0 : index
    %c0_15 = arith.constant 0 : index
    %c0_16 = arith.constant 0 : index
    %77 = vector.load %arg2[%76, %c0_14, %c0_15, %c0_16] : memref<8x2x8x128xf32, #tpu.memory_space<vmem>>, vector<1x2x8x128xf32>
    %78 = vector.shape_cast %77 : vector<1x2x8x128xf32> to vector<2x8x128xf32>
    %79 = vector.extract_strided_slice %75 {offsets = [0, 0, 0], sizes = [1, 2, 128], strides = [1, 1, 1]} : vector<2x2x128xf32> to vector<1x2x128xf32>
    %80 = vector.shape_cast %79 : vector<1x2x128xf32> to vector<2x128xf32>
    %81 = vector.extract_strided_slice %75 {offsets = [1, 0, 0], sizes = [1, 2, 128], strides = [1, 1, 1]} : vector<2x2x128xf32> to vector<1x2x128xf32>
    %82 = vector.shape_cast %81 : vector<1x2x128xf32> to vector<2x128xf32>
    %83 = vector.extract_strided_slice %78 {offsets = [0, 0, 0], sizes = [1, 8, 128], strides = [1, 1, 1]} : vector<2x8x128xf32> to vector<1x8x128xf32>
    %84 = vector.shape_cast %83 : vector<1x8x128xf32> to vector<8x128xf32>
    %85 = vector.extract_strided_slice %78 {offsets = [1, 0, 0], sizes = [1, 8, 128], strides = [1, 1, 1]} : vector<2x8x128xf32> to vector<1x8x128xf32>
    %86 = vector.shape_cast %85 : vector<1x8x128xf32> to vector<8x128xf32>
    %87 = arith.addf %84, %86 : vector<8x128xf32>
    %88 = arith.subf %86, %84 : vector<8x128xf32>
    %89 = arith.addf %80, %82 : vector<2x128xf32>
    %90 = vector.shape_cast %89 : vector<2x128xf32> to vector<2x1x128xf32>
    %91 = vector.shape_cast %84 : vector<8x128xf32> to vector<1x8x128xf32>
    %92 = vector.broadcast %90 : vector<2x1x128xf32> to vector<2x8x128xf32>
    %93 = vector.broadcast %91 : vector<1x8x128xf32> to vector<2x8x128xf32>
    %94 = arith.mulf %92, %93 : vector<2x8x128xf32>
    %95 = vector.shape_cast %82 : vector<2x128xf32> to vector<2x1x128xf32>
    %96 = vector.shape_cast %87 : vector<8x128xf32> to vector<1x8x128xf32>
    %97 = vector.broadcast %95 : vector<2x1x128xf32> to vector<2x8x128xf32>
    %98 = vector.broadcast %96 : vector<1x8x128xf32> to vector<2x8x128xf32>
    %99 = arith.mulf %97, %98 : vector<2x8x128xf32>
    %100 = arith.subf %94, %99 : vector<2x8x128xf32>
    %101 = arith.addf %65, %100 : vector<2x8x128xf32>
    %102 = vector.shape_cast %80 : vector<2x128xf32> to vector<2x1x128xf32>
    %103 = vector.shape_cast %88 : vector<8x128xf32> to vector<1x8x128xf32>
    %104 = vector.broadcast %102 : vector<2x1x128xf32> to vector<2x8x128xf32>
    %105 = vector.broadcast %103 : vector<1x8x128xf32> to vector<2x8x128xf32>
    %106 = arith.mulf %104, %105 : vector<2x8x128xf32>
    %107 = arith.addf %94, %106 : vector<2x8x128xf32>
    %108 = arith.addf %72, %107 : vector<2x8x128xf32>
    %c3_i32 = arith.constant 3 : i32
    %109 = arith.index_cast %c3_i32 : i32 to index
    %c0_17 = arith.constant 0 : index
    %c0_18 = arith.constant 0 : index
    %c0_19 = arith.constant 0 : index
    %110 = vector.load %arg1[%109, %c0_17, %c0_18, %c0_19] : memref<8x2x2x128xf32, #tpu.memory_space<vmem>>, vector<1x2x2x128xf32>
    %111 = vector.shape_cast %110 : vector<1x2x2x128xf32> to vector<2x2x128xf32>
    %112 = arith.index_cast %c3_i32 : i32 to index
    %c0_20 = arith.constant 0 : index
    %c0_21 = arith.constant 0 : index
    %c0_22 = arith.constant 0 : index
    %113 = vector.load %arg2[%112, %c0_20, %c0_21, %c0_22] : memref<8x2x8x128xf32, #tpu.memory_space<vmem>>, vector<1x2x8x128xf32>
    %114 = vector.shape_cast %113 : vector<1x2x8x128xf32> to vector<2x8x128xf32>
    %115 = vector.extract_strided_slice %111 {offsets = [0, 0, 0], sizes = [1, 2, 128], strides = [1, 1, 1]} : vector<2x2x128xf32> to vector<1x2x128xf32>
    %116 = vector.shape_cast %115 : vector<1x2x128xf32> to vector<2x128xf32>
    %117 = vector.extract_strided_slice %111 {offsets = [1, 0, 0], sizes = [1, 2, 128], strides = [1, 1, 1]} : vector<2x2x128xf32> to vector<1x2x128xf32>
    %118 = vector.shape_cast %117 : vector<1x2x128xf32> to vector<2x128xf32>
    %119 = vector.extract_strided_slice %114 {offsets = [0, 0, 0], sizes = [1, 8, 128], strides = [1, 1, 1]} : vector<2x8x128xf32> to vector<1x8x128xf32>
    %120 = vector.shape_cast %119 : vector<1x8x128xf32> to vector<8x128xf32>
    %121 = vector.extract_strided_slice %114 {offsets = [1, 0, 0], sizes = [1, 8, 128], strides = [1, 1, 1]} : vector<2x8x128xf32> to vector<1x8x128xf32>
    %122 = vector.shape_cast %121 : vector<1x8x128xf32> to vector<8x128xf32>
    %123 = arith.addf %120, %122 : vector<8x128xf32>
    %124 = arith.subf %122, %120 : vector<8x128xf32>
    %125 = arith.addf %116, %118 : vector<2x128xf32>
    %126 = vector.shape_cast %125 : vector<2x128xf32> to vector<2x1x128xf32>
    %127 = vector.shape_cast %120 : vector<8x128xf32> to vector<1x8x128xf32>
    %128 = vector.broadcast %126 : vector<2x1x128xf32> to vector<2x8x128xf32>
    %129 = vector.broadcast %127 : vector<1x8x128xf32> to vector<2x8x128xf32>
    %130 = arith.mulf %128, %129 : vector<2x8x128xf32>
    %131 = vector.shape_cast %118 : vector<2x128xf32> to vector<2x1x128xf32>
    %132 = vector.shape_cast %123 : vector<8x128xf32> to vector<1x8x128xf32>
    %133 = vector.broadcast %131 : vector<2x1x128xf32> to vector<2x8x128xf32>
    %134 = vector.broadcast %132 : vector<1x8x128xf32> to vector<2x8x128xf32>
    %135 = arith.mulf %133, %134 : vector<2x8x128xf32>
    %136 = arith.subf %130, %135 : vector<2x8x128xf32>
    %137 = arith.addf %101, %136 : vector<2x8x128xf32>
    %138 = vector.shape_cast %116 : vector<2x128xf32> to vector<2x1x128xf32>
    %139 = vector.shape_cast %124 : vector<8x128xf32> to vector<1x8x128xf32>
    %140 = vector.broadcast %138 : vector<2x1x128xf32> to vector<2x8x128xf32>
    %141 = vector.broadcast %139 : vector<1x8x128xf32> to vector<2x8x128xf32>
    %142 = arith.mulf %140, %141 : vector<2x8x128xf32>
    %143 = arith.addf %130, %142 : vector<2x8x128xf32>
    %144 = arith.addf %108, %143 : vector<2x8x128xf32>
    %c4_i32 = arith.constant 4 : i32
    %145 = arith.index_cast %c4_i32 : i32 to index
    %c0_23 = arith.constant 0 : index
    %c0_24 = arith.constant 0 : index
    %c0_25 = arith.constant 0 : index
    %146 = vector.load %arg1[%145, %c0_23, %c0_24, %c0_25] : memref<8x2x2x128xf32, #tpu.memory_space<vmem>>, vector<1x2x2x128xf32>
    %147 = vector.shape_cast %146 : vector<1x2x2x128xf32> to vector<2x2x128xf32>
    %148 = arith.index_cast %c4_i32 : i32 to index
    %c0_26 = arith.constant 0 : index
    %c0_27 = arith.constant 0 : index
    %c0_28 = arith.constant 0 : index
    %149 = vector.load %arg2[%148, %c0_26, %c0_27, %c0_28] : memref<8x2x8x128xf32, #tpu.memory_space<vmem>>, vector<1x2x8x128xf32>
    %150 = vector.shape_cast %149 : vector<1x2x8x128xf32> to vector<2x8x128xf32>
    %151 = vector.extract_strided_slice %147 {offsets = [0, 0, 0], sizes = [1, 2, 128], strides = [1, 1, 1]} : vector<2x2x128xf32> to vector<1x2x128xf32>
    %152 = vector.shape_cast %151 : vector<1x2x128xf32> to vector<2x128xf32>
    %153 = vector.extract_strided_slice %147 {offsets = [1, 0, 0], sizes = [1, 2, 128], strides = [1, 1, 1]} : vector<2x2x128xf32> to vector<1x2x128xf32>
    %154 = vector.shape_cast %153 : vector<1x2x128xf32> to vector<2x128xf32>
    %155 = vector.extract_strided_slice %150 {offsets = [0, 0, 0], sizes = [1, 8, 128], strides = [1, 1, 1]} : vector<2x8x128xf32> to vector<1x8x128xf32>
    %156 = vector.shape_cast %155 : vector<1x8x128xf32> to vector<8x128xf32>
    %157 = vector.extract_strided_slice %150 {offsets = [1, 0, 0], sizes = [1, 8, 128], strides = [1, 1, 1]} : vector<2x8x128xf32> to vector<1x8x128xf32>
    %158 = vector.shape_cast %157 : vector<1x8x128xf32> to vector<8x128xf32>
    %159 = arith.addf %156, %158 : vector<8x128xf32>
    %160 = arith.subf %158, %156 : vector<8x128xf32>
    %161 = arith.addf %152, %154 : vector<2x128xf32>
    %162 = vector.shape_cast %161 : vector<2x128xf32> to vector<2x1x128xf32>
    %163 = vector.shape_cast %156 : vector<8x128xf32> to vector<1x8x128xf32>
    %164 = vector.broadcast %162 : vector<2x1x128xf32> to vector<2x8x128xf32>
    %165 = vector.broadcast %163 : vector<1x8x128xf32> to vector<2x8x128xf32>
    %166 = arith.mulf %164, %165 : vector<2x8x128xf32>
    %167 = vector.shape_cast %154 : vector<2x128xf32> to vector<2x1x128xf32>
    %168 = vector.shape_cast %159 : vector<8x128xf32> to vector<1x8x128xf32>
    %169 = vector.broadcast %167 : vector<2x1x128xf32> to vector<2x8x128xf32>
    %170 = vector.broadcast %168 : vector<1x8x128xf32> to vector<2x8x128xf32>
    %171 = arith.mulf %169, %170 : vector<2x8x128xf32>
    %172 = arith.subf %166, %171 : vector<2x8x128xf32>
    %173 = arith.addf %137, %172 : vector<2x8x128xf32>
    %174 = vector.shape_cast %152 : vector<2x128xf32> to vector<2x1x128xf32>
    %175 = vector.shape_cast %160 : vector<8x128xf32> to vector<1x8x128xf32>
    %176 = vector.broadcast %174 : vector<2x1x128xf32> to vector<2x8x128xf32>
    %177 = vector.broadcast %175 : vector<1x8x128xf32> to vector<2x8x128xf32>
    %178 = arith.mulf %176, %177 : vector<2x8x128xf32>
    %179 = arith.addf %166, %178 : vector<2x8x128xf32>
    %180 = arith.addf %144, %179 : vector<2x8x128xf32>
    %c5_i32 = arith.constant 5 : i32
    %181 = arith.index_cast %c5_i32 : i32 to index
    %c0_29 = arith.constant 0 : index
    %c0_30 = arith.constant 0 : index
    %c0_31 = arith.constant 0 : index
    %182 = vector.load %arg1[%181, %c0_29, %c0_30, %c0_31] : memref<8x2x2x128xf32, #tpu.memory_space<vmem>>, vector<1x2x2x128xf32>
    %183 = vector.shape_cast %182 : vector<1x2x2x128xf32> to vector<2x2x128xf32>
    %184 = arith.index_cast %c5_i32 : i32 to index
    %c0_32 = arith.constant 0 : index
    %c0_33 = arith.constant 0 : index
    %c0_34 = arith.constant 0 : index
    %185 = vector.load %arg2[%184, %c0_32, %c0_33, %c0_34] : memref<8x2x8x128xf32, #tpu.memory_space<vmem>>, vector<1x2x8x128xf32>
    %186 = vector.shape_cast %185 : vector<1x2x8x128xf32> to vector<2x8x128xf32>
    %187 = vector.extract_strided_slice %183 {offsets = [0, 0, 0], sizes = [1, 2, 128], strides = [1, 1, 1]} : vector<2x2x128xf32> to vector<1x2x128xf32>
    %188 = vector.shape_cast %187 : vector<1x2x128xf32> to vector<2x128xf32>
    %189 = vector.extract_strided_slice %183 {offsets = [1, 0, 0], sizes = [1, 2, 128], strides = [1, 1, 1]} : vector<2x2x128xf32> to vector<1x2x128xf32>
    %190 = vector.shape_cast %189 : vector<1x2x128xf32> to vector<2x128xf32>
    %191 = vector.extract_strided_slice %186 {offsets = [0, 0, 0], sizes = [1, 8, 128], strides = [1, 1, 1]} : vector<2x8x128xf32> to vector<1x8x128xf32>
    %192 = vector.shape_cast %191 : vector<1x8x128xf32> to vector<8x128xf32>
    %193 = vector.extract_strided_slice %186 {offsets = [1, 0, 0], sizes = [1, 8, 128], strides = [1, 1, 1]} : vector<2x8x128xf32> to vector<1x8x128xf32>
    %194 = vector.shape_cast %193 : vector<1x8x128xf32> to vector<8x128xf32>
    %195 = arith.addf %192, %194 : vector<8x128xf32>
    %196 = arith.subf %194, %192 : vector<8x128xf32>
    %197 = arith.addf %188, %190 : vector<2x128xf32>
    %198 = vector.shape_cast %197 : vector<2x128xf32> to vector<2x1x128xf32>
    %199 = vector.shape_cast %192 : vector<8x128xf32> to vector<1x8x128xf32>
    %200 = vector.broadcast %198 : vector<2x1x128xf32> to vector<2x8x128xf32>
    %201 = vector.broadcast %199 : vector<1x8x128xf32> to vector<2x8x128xf32>
    %202 = arith.mulf %200, %201 : vector<2x8x128xf32>
    %203 = vector.shape_cast %190 : vector<2x128xf32> to vector<2x1x128xf32>
    %204 = vector.shape_cast %195 : vector<8x128xf32> to vector<1x8x128xf32>
    %205 = vector.broadcast %203 : vector<2x1x128xf32> to vector<2x8x128xf32>
    %206 = vector.broadcast %204 : vector<1x8x128xf32> to vector<2x8x128xf32>
    %207 = arith.mulf %205, %206 : vector<2x8x128xf32>
    %208 = arith.subf %202, %207 : vector<2x8x128xf32>
    %209 = arith.addf %173, %208 : vector<2x8x128xf32>
    %210 = vector.shape_cast %188 : vector<2x128xf32> to vector<2x1x128xf32>
    %211 = vector.shape_cast %196 : vector<8x128xf32> to vector<1x8x128xf32>
    %212 = vector.broadcast %210 : vector<2x1x128xf32> to vector<2x8x128xf32>
    %213 = vector.broadcast %211 : vector<1x8x128xf32> to vector<2x8x128xf32>
    %214 = arith.mulf %212, %213 : vector<2x8x128xf32>
    %215 = arith.addf %202, %214 : vector<2x8x128xf32>
    %216 = arith.addf %180, %215 : vector<2x8x128xf32>
    %c6_i32 = arith.constant 6 : i32
    %217 = arith.index_cast %c6_i32 : i32 to index
    %c0_35 = arith.constant 0 : index
    %c0_36 = arith.constant 0 : index
    %c0_37 = arith.constant 0 : index
    %218 = vector.load %arg1[%217, %c0_35, %c0_36, %c0_37] : memref<8x2x2x128xf32, #tpu.memory_space<vmem>>, vector<1x2x2x128xf32>
    %219 = vector.shape_cast %218 : vector<1x2x2x128xf32> to vector<2x2x128xf32>
    %220 = arith.index_cast %c6_i32 : i32 to index
    %c0_38 = arith.constant 0 : index
    %c0_39 = arith.constant 0 : index
    %c0_40 = arith.constant 0 : index
    %221 = vector.load %arg2[%220, %c0_38, %c0_39, %c0_40] : memref<8x2x8x128xf32, #tpu.memory_space<vmem>>, vector<1x2x8x128xf32>
    %222 = vector.shape_cast %221 : vector<1x2x8x128xf32> to vector<2x8x128xf32>
    %223 = vector.extract_strided_slice %219 {offsets = [0, 0, 0], sizes = [1, 2, 128], strides = [1, 1, 1]} : vector<2x2x128xf32> to vector<1x2x128xf32>
    %224 = vector.shape_cast %223 : vector<1x2x128xf32> to vector<2x128xf32>
    %225 = vector.extract_strided_slice %219 {offsets = [1, 0, 0], sizes = [1, 2, 128], strides = [1, 1, 1]} : vector<2x2x128xf32> to vector<1x2x128xf32>
    %226 = vector.shape_cast %225 : vector<1x2x128xf32> to vector<2x128xf32>
    %227 = vector.extract_strided_slice %222 {offsets = [0, 0, 0], sizes = [1, 8, 128], strides = [1, 1, 1]} : vector<2x8x128xf32> to vector<1x8x128xf32>
    %228 = vector.shape_cast %227 : vector<1x8x128xf32> to vector<8x128xf32>
    %229 = vector.extract_strided_slice %222 {offsets = [1, 0, 0], sizes = [1, 8, 128], strides = [1, 1, 1]} : vector<2x8x128xf32> to vector<1x8x128xf32>
    %230 = vector.shape_cast %229 : vector<1x8x128xf32> to vector<8x128xf32>
    %231 = arith.addf %228, %230 : vector<8x128xf32>
    %232 = arith.subf %230, %228 : vector<8x128xf32>
    %233 = arith.addf %224, %226 : vector<2x128xf32>
    %234 = vector.shape_cast %233 : vector<2x128xf32> to vector<2x1x128xf32>
    %235 = vector.shape_cast %228 : vector<8x128xf32> to vector<1x8x128xf32>
    %236 = vector.broadcast %234 : vector<2x1x128xf32> to vector<2x8x128xf32>
    %237 = vector.broadcast %235 : vector<1x8x128xf32> to vector<2x8x128xf32>
    %238 = arith.mulf %236, %237 : vector<2x8x128xf32>
    %239 = vector.shape_cast %226 : vector<2x128xf32> to vector<2x1x128xf32>
    %240 = vector.shape_cast %231 : vector<8x128xf32> to vector<1x8x128xf32>
    %241 = vector.broadcast %239 : vector<2x1x128xf32> to vector<2x8x128xf32>
    %242 = vector.broadcast %240 : vector<1x8x128xf32> to vector<2x8x128xf32>
    %243 = arith.mulf %241, %242 : vector<2x8x128xf32>
    %244 = arith.subf %238, %243 : vector<2x8x128xf32>
    %245 = arith.addf %209, %244 : vector<2x8x128xf32>
    %246 = vector.shape_cast %224 : vector<2x128xf32> to vector<2x1x128xf32>
    %247 = vector.shape_cast %232 : vector<8x128xf32> to vector<1x8x128xf32>
    %248 = vector.broadcast %246 : vector<2x1x128xf32> to vector<2x8x128xf32>
    %249 = vector.broadcast %247 : vector<1x8x128xf32> to vector<2x8x128xf32>
    %250 = arith.mulf %248, %249 : vector<2x8x128xf32>
    %251 = arith.addf %238, %250 : vector<2x8x128xf32>
    %252 = arith.addf %216, %251 : vector<2x8x128xf32>
    %c7_i32 = arith.constant 7 : i32
    %253 = arith.index_cast %c7_i32 : i32 to index
    %c0_41 = arith.constant 0 : index
    %c0_42 = arith.constant 0 : index
    %c0_43 = arith.constant 0 : index
    %254 = vector.load %arg1[%253, %c0_41, %c0_42, %c0_43] : memref<8x2x2x128xf32, #tpu.memory_space<vmem>>, vector<1x2x2x128xf32>
    %255 = vector.shape_cast %254 : vector<1x2x2x128xf32> to vector<2x2x128xf32>
    %256 = arith.index_cast %c7_i32 : i32 to index
    %c0_44 = arith.constant 0 : index
    %c0_45 = arith.constant 0 : index
    %c0_46 = arith.constant 0 : index
    %257 = vector.load %arg2[%256, %c0_44, %c0_45, %c0_46] : memref<8x2x8x128xf32, #tpu.memory_space<vmem>>, vector<1x2x8x128xf32>
    %258 = vector.shape_cast %257 : vector<1x2x8x128xf32> to vector<2x8x128xf32>
    %259 = vector.extract_strided_slice %255 {offsets = [0, 0, 0], sizes = [1, 2, 128], strides = [1, 1, 1]} : vector<2x2x128xf32> to vector<1x2x128xf32>
    %260 = vector.shape_cast %259 : vector<1x2x128xf32> to vector<2x128xf32>
    %261 = vector.extract_strided_slice %255 {offsets = [1, 0, 0], sizes = [1, 2, 128], strides = [1, 1, 1]} : vector<2x2x128xf32> to vector<1x2x128xf32>
    %262 = vector.shape_cast %261 : vector<1x2x128xf32> to vector<2x128xf32>
    %263 = vector.extract_strided_slice %258 {offsets = [0, 0, 0], sizes = [1, 8, 128], strides = [1, 1, 1]} : vector<2x8x128xf32> to vector<1x8x128xf32>
    %264 = vector.shape_cast %263 : vector<1x8x128xf32> to vector<8x128xf32>
    %265 = vector.extract_strided_slice %258 {offsets = [1, 0, 0], sizes = [1, 8, 128], strides = [1, 1, 1]} : vector<2x8x128xf32> to vector<1x8x128xf32>
    %266 = vector.shape_cast %265 : vector<1x8x128xf32> to vector<8x128xf32>
    %267 = arith.addf %264, %266 : vector<8x128xf32>
    %268 = arith.subf %266, %264 : vector<8x128xf32>
    %269 = arith.addf %260, %262 : vector<2x128xf32>
    %270 = vector.shape_cast %269 : vector<2x128xf32> to vector<2x1x128xf32>
    %271 = vector.shape_cast %264 : vector<8x128xf32> to vector<1x8x128xf32>
    %272 = vector.broadcast %270 : vector<2x1x128xf32> to vector<2x8x128xf32>
    %273 = vector.broadcast %271 : vector<1x8x128xf32> to vector<2x8x128xf32>
    %274 = arith.mulf %272, %273 : vector<2x8x128xf32>
    %275 = vector.shape_cast %262 : vector<2x128xf32> to vector<2x1x128xf32>
    %276 = vector.shape_cast %267 : vector<8x128xf32> to vector<1x8x128xf32>
    %277 = vector.broadcast %275 : vector<2x1x128xf32> to vector<2x8x128xf32>
    %278 = vector.broadcast %276 : vector<1x8x128xf32> to vector<2x8x128xf32>
    %279 = arith.mulf %277, %278 : vector<2x8x128xf32>
    %280 = arith.subf %274, %279 : vector<2x8x128xf32>
    %281 = arith.addf %245, %280 : vector<2x8x128xf32>
    %282 = vector.shape_cast %260 : vector<2x128xf32> to vector<2x1x128xf32>
    %283 = vector.shape_cast %268 : vector<8x128xf32> to vector<1x8x128xf32>
    %284 = vector.broadcast %282 : vector<2x1x128xf32> to vector<2x8x128xf32>
    %285 = vector.broadcast %283 : vector<1x8x128xf32> to vector<2x8x128xf32>
    %286 = arith.mulf %284, %285 : vector<2x8x128xf32>
    %287 = arith.addf %274, %286 : vector<2x8x128xf32>
    %288 = arith.addf %252, %287 : vector<2x8x128xf32>
    %c8_i32 = arith.constant 8 : i32
    %c0_47 = arith.constant 0 : index
    %c0_48 = arith.constant 0 : index
    %c0_49 = arith.constant 0 : index
    %c0_50 = arith.constant 0 : index
    %289 = vector.load %arg3[%c0_47, %c0_48, %c0_49, %c0_50] : memref<2x2x8x128xf32, #tpu.memory_space<vmem>>, vector<1x2x8x128xf32>
    %290 = vector.shape_cast %289 : vector<1x2x8x128xf32> to vector<2x8x128xf32>
    %291 = vector.shape_cast %281 : vector<2x8x128xf32> to vector<1x2x8x128xf32>
    tpu.vector_store %arg3[%c0_47, %c0_48, %c0_49, %c0_50], %291 {strides = array<i32>} : memref<2x2x8x128xf32, #tpu.memory_space<vmem>>, vector<1x2x8x128xf32>,
    %c1 = arith.constant 1 : index
    %c0_51 = arith.constant 0 : index
    %c0_52 = arith.constant 0 : index
    %c0_53 = arith.constant 0 : index
    %292 = vector.load %arg3[%c1, %c0_51, %c0_52, %c0_53] : memref<2x2x8x128xf32, #tpu.memory_space<vmem>>, vector<1x2x8x128xf32>
    %293 = vector.shape_cast %292 : vector<1x2x8x128xf32> to vector<2x8x128xf32>
    %294 = vector.shape_cast %288 : vector<2x8x128xf32> to vector<1x2x8x128xf32>
    tpu.vector_store %arg3[%c1, %c0_51, %c0_52, %c0_53], %294 {strides = array<i32>} : memref<2x2x8x128xf32, #tpu.memory_space<vmem>>, vector<1x2x8x128xf32>,
    return
  }
  func.func @transform_0(%arg0: i32) -> (i32, i32, i32, i32) {
    %c0_i32 = arith.constant 0 : i32
    %c0_i32_0 = arith.constant 0 : i32
    %c0_i32_1 = arith.constant 0 : i32
    %c0_i32_2 = arith.constant 0 : i32
    return %c0_i32, %c0_i32_0, %c0_i32_1, %arg0 : i32, i32, i32, i32
  }
  func.func @transform_1(%arg0: i32) -> (i32, i32, i32, i32) {
    %c0_i32 = arith.constant 0 : i32
    %c0_i32_0 = arith.constant 0 : i32
    %c0_i32_1 = arith.constant 0 : i32
    %c0_i32_2 = arith.constant 0 : i32
    return %c0_i32, %c0_i32_0, %c0_i32_1, %arg0 : i32, i32, i32, i32
  }
  func.func @transform_2(%arg0: i32) -> (i32, i32, i32, i32) {
    %c0_i32 = arith.constant 0 : i32
    %c0_i32_0 = arith.constant 0 : i32
    %c0_i32_1 = arith.constant 0 : i32
    %c0_i32_2 = arith.constant 0 : i32
    return %c0_i32, %c0_i32_0, %c0_i32_1, %arg0 : i32, i32, i32, i32
  }
}

</mosaic_0001>

<llo_original>
// kernel: reverse.0
$region0: #{reverse.0}
  %s0 = inlined_call_operand.vmem [shape: f32[2,4,16,7], index: 0, kind: input, shape index: {}]
  %s1 = inlined_call_operand.vmem [shape: f32[2,4,16,7], index: 1, kind: output, shape index: {}]
  $region1: #{reverse.0} parent=0
    #allocation0 [shape = 'u8[65536]{0}', space=vmem, size = 0x10000, scoped, tag = 'operand span for operand 0']
    #allocation1 [shape = 'u8[32768]{0}', space=vmem, size = 0x8000, scoped, tag = 'operand span for operand 1']
    %s2 = scalar_lea.vmem [#allocation0], 8
    // Predicated region
    $region2: #{reverse.0} parent=1 // pred_check
      _
    $region3: #{reverse.0} parent=1 // pred_check_branch
      %4 = sbr.rel (0) target = $region5
    $region4: #{reverse.0} parent=1 // pred_region
      // Predicated region
      $region6: #{reverse.0} parent=4 // pred_check
        _
      $region7: #{reverse.0} parent=4 // pred_check_branch
        %6 = sbr.rel (0) target = $region9
      $region8: #{reverse.0} parent=4 // pred_region
        // Predicated region
        $region21: #{reverse.0} parent=8 // pred_check
          _
        $region22: #{reverse.0} parent=8 // pred_check_branch
          %36 = sbr.rel (0) target = $region24
        $region23: #{reverse.0} parent=8 // pred_region
          loop: start=0, step=1, limit=1
          $region25: #{reverse.0} parent=23 // loop_pre_header
            _
          $region26: #{reverse.0} parent=23 // loop_header
            %s38 = sphi 0, %s42
            %p39 = scmp.ge.s32.totalorder %s38, 1
            %s43 = sphi %s0, %s0
            %s44 = sphi %s2, %s2
          $region27: #{reverse.0} parent=23 // loop_header_branch
            %41 = sbr.rel (%p39) target = $region31
          $region28: #{reverse.0} parent=23 // loop_body
            %v45 = vld [vmem:[%s43] sm:$0xff]
            %46 = vst [vmem:[%s44] sm:$0xff] %v45
            %v47 = vld [vmem:[%s43 + $0x8] sm:$0xff]
            %48 = vst [vmem:[%s44 + $0x10] sm:$0xff] %v47
            %v49 = vld [vmem:[%s43 + $0x10] sm:$0xff]
            %50 = vst [vmem:[%s44 + $0x20] sm:$0xff] %v49
            %v51 = vld [vmem:[%s43 + $0x18] sm:$0xff]
            %52 = vst [vmem:[%s44 + $0x30] sm:$0xff] %v51
            %v53 = vld [vmem:[%s43 + $0x20] sm:$0xff]
            %54 = vst [vmem:[%s44 + $0x40] sm:$0xff] %v53
            %v55 = vld [vmem:[%s43 + $0x28] sm:$0xff]
            %56 = vst [vmem:[%s44 + $0x50] sm:$0xff] %v55
            %v57 = vld [vmem:[%s43 + $0x30] sm:$0xff]
            %58 = vst [vmem:[%s44 + $0x60] sm:$0xff] %v57
            %v59 = vld [vmem:[%s43 + $0x38] sm:$0xff]
            %60 = vst [vmem:[%s44 + $0x70] sm:$0xff] %v59
          $region29: #{reverse.0} parent=23 // loop_footer
            %s42 = sadd.s32 1, %s38
          $region30: #{reverse.0} parent=23 // loop_footer_branch
            %37 = sbr.rel target = $region26
          $region31: #{reverse.0} parent=23 // loop_exit
            _
        $region24: #{reverse.0} parent=8 // pred_fallthru
          _
        // Predicated region
        $region32: #{reverse.0} parent=8 // pred_check
          _
        $region33: #{reverse.0} parent=8 // pred_check_branch
          %62 = sbr.rel target = $region35
        $region34: #{reverse.0} parent=8 // pred_region
          _
        $region35: #{reverse.0} parent=8 // pred_fallthru
          _
      $region9: #{reverse.0} parent=4 // pred_fallthru
        _
      // Predicated region
      $region10: #{reverse.0} parent=4 // pred_check
        _
      $region11: #{reverse.0} parent=4 // pred_check_branch
        %8 = sbr.rel target = $region13
      $region12: #{reverse.0} parent=4 // pred_region
        %s10 = ssub.s32 256, 1
        loop: start=0, step=1, limit=1
        $region14: #{reverse.0} parent=12 // loop_pre_header
          _
        $region15: #{reverse.0} parent=12 // loop_header
          %s12 = sphi 0, %s16
          %p13 = scmp.ge.s32.totalorder %s12, 1
          %s17 = sphi %s0, %s0
          %s18 = sphi %s2, %s2
        $region16: #{reverse.0} parent=12 // loop_header_branch
          %15 = sbr.rel (%p13) target = $region20
        $region17: #{reverse.0} parent=12 // loop_body
          %v19 = vld [vmem:[%s17] sm:%s10]
          %20 = vst [vmem:[%s18] sm:%s10] %v19
          %v21 = vld [vmem:[%s17 + $0x8] sm:%s10]
          %22 = vst [vmem:[%s18 + $0x10] sm:%s10] %v21
          %v23 = vld [vmem:[%s17 + $0x10] sm:%s10]
          %24 = vst [vmem:[%s18 + $0x20] sm:%s10] %v23
          %v25 = vld [vmem:[%s17 + $0x18] sm:%s10]
          %26 = vst [vmem:[%s18 + $0x30] sm:%s10] %v25
          %v27 = vld [vmem:[%s17 + $0x20] sm:%s10]
          %28 = vst [vmem:[%s18 + $0x40] sm:%s10] %v27
          %v29 = vld [vmem:[%s17 + $0x28] sm:%s10]
          %30 = vst [vmem:[%s18 + $0x50] sm:%s10] %v29
          %v31 = vld [vmem:[%s17 + $0x30] sm:%s10]
          %32 = vst [vmem:[%s18 + $0x60] sm:%s10] %v31
          %v33 = vld [vmem:[%s17 + $0x38] sm:%s10]
          %34 = vst [vmem:[%s18 + $0x70] sm:%s10] %v33
        $region18: #{reverse.0} parent=12 // loop_footer
          %s16 = sadd.s32 1, %s12
        $region19: #{reverse.0} parent=12 // loop_footer_branch
          %11 = sbr.rel target = $region15
        $region20: #{reverse.0} parent=12 // loop_exit
          _
      $region13: #{reverse.0} parent=4 // pred_fallthru
        _
    $region5: #{reverse.0} parent=1 // pred_fallthru
      _
    %63 = vnop
    %s64 = scalar_lea.vmem [#allocation0], 7
    %v65 = vld [vmem:[%s64] ss:$-1 sm:$0xff]
    %v66 = vrot.slane %v65, 1
    %67 = vst [vmem:[#allocation1] sm:$0xff] %v66
    %s68 = scalar_lea.vmem [#allocation0], 8
    %s69 = scalar_lea.vmem %s68, 7 [#allocation0]
    %v70 = vld [vmem:[%s69] ss:$-1 sm:$0xff]
    %v71 = vrot.slane %v70, 1
    %v72 = vlaneseq
    %v73 = vshrl.u32 %v72, 7
    %vm74 = vcmp.lt.s32.totalorder %v73, 7
    %75 = vst.msk [vmem:[#allocation1] sm:$0xff] %vm74, %v71
    %s76 = scalar_lea.vmem [#allocation1], 8
    %s77 = scalar_lea.vmem [#allocation0], 16
    %s78 = scalar_lea.vmem %s77, 7 [#allocation0]
    %v79 = vld [vmem:[%s78] ss:$-1 sm:$0xff]
    %v80 = vrot.slane %v79, 1
    %81 = vst [vmem:[%s76] sm:$0xff] %v80
    %s82 = scalar_lea.vmem %s77, 8 [#allocation0]
    %s83 = scalar_lea.vmem %s82, 7 [#allocation0]
    %v84 = vld [vmem:[%s83] ss:$-1 sm:$0xff]
    %v85 = vrot.slane %v84, 1
    %v86 = vlaneseq
    %v87 = vshrl.u32 %v86, 7
    %vm88 = vcmp.lt.s32.totalorder %v87, 7
    %89 = vst.msk [vmem:[%s76] sm:$0xff] %vm88, %v85
    %s90 = scalar_lea.vmem [#allocation1], 16
    %s91 = scalar_lea.vmem [#allocation0], 32
    %s92 = scalar_lea.vmem %s91, 7 [#allocation0]
    %v93 = vld [vmem:[%s92] ss:$-1 sm:$0xff]
    %v94 = vrot.slane %v93, 1
    %95 = vst [vmem:[%s90] sm:$0xff] %v94
    %s96 = scalar_lea.vmem %s91, 8 [#allocation0]
    %s97 = scalar_lea.vmem %s96, 7 [#allocation0]
    %v98 = vld [vmem:[%s97] ss:$-1 sm:$0xff]
    %v99 = vrot.slane %v98, 1
    %v100 = vlaneseq
    %v101 = vshrl.u32 %v100, 7
    %vm102 = vcmp.lt.s32.totalorder %v101, 7
    %103 = vst.msk [vmem:[%s90] sm:$0xff] %vm102, %v99
    %s104 = scalar_lea.vmem [#allocation1], 24
    %s105 = scalar_lea.vmem [#allocation0], 48
    %s106 = scalar_lea.vmem %s105, 7 [#allocation0]
    %v107 = vld [vmem:[%s106] ss:$-1 sm:$0xff]
    %v108 = vrot.slane %v107, 1
    %109 = vst [vmem:[%s104] sm:$0xff] %v108
    %s110 = scalar_lea.vmem %s105, 8 [#allocation0]
    %s111 = scalar_lea.vmem %s110, 7 [#allocation0]
    %v112 = vld [vmem:[%s111] ss:$-1 sm:$0xff]
    %v113 = vrot.slane %v112, 1
    %v114 = vlaneseq
    %v115 = vshrl.u32 %v114, 7
    %vm116 = vcmp.lt.s32.totalorder %v115, 7
    %117 = vst.msk [vmem:[%s104] sm:$0xff] %vm116, %v113
    %s118 = scalar_lea.vmem [#allocation1], 32
    %s119 = scalar_lea.vmem [#allocation0], 64
    %s120 = scalar_lea.vmem %s119, 7 [#allocation0]
    %v121 = vld [vmem:[%s120] ss:$-1 sm:$0xff]
    %v122 = vrot.slane %v121, 1
    %123 = vst [vmem:[%s118] sm:$0xff] %v122
    %s124 = scalar_lea.vmem %s119, 8 [#allocation0]
    %s125 = scalar_lea.vmem %s124, 7 [#allocation0]
    %v126 = vld [vmem:[%s125] ss:$-1 sm:$0xff]
    %v127 = vrot.slane %v126, 1
    %v128 = vlaneseq
    %v129 = vshrl.u32 %v128, 7
    %vm130 = vcmp.lt.s32.totalorder %v129, 7
    %131 = vst.msk [vmem:[%s118] sm:$0xff] %vm130, %v127
    %s132 = scalar_lea.vmem [#allocation1], 40
    %s133 = scalar_lea.vmem [#allocation0], 80
    %s134 = scalar_lea.vmem %s133, 7 [#allocation0]
    %v135 = vld [vmem:[%s134] ss:$-1 sm:$0xff]
    %v136 = vrot.slane %v135, 1
    %137 = vst [vmem:[%s132] sm:$0xff] %v136
    %s138 = scalar_lea.vmem %s133, 8 [#allocation0]
    %s139 = scalar_lea.vmem %s138, 7 [#allocation0]
    %v140 = vld [vmem:[%s139] ss:$-1 sm:$0xff]
    %v141 = vrot.slane %v140, 1
    %v142 = vlaneseq
    %v143 = vshrl.u32 %v142, 7
    %vm144 = vcmp.lt.s32.totalorder %v143, 7
    %145 = vst.msk [vmem:[%s132] sm:$0xff] %vm144, %v141
    %s146 = scalar_lea.vmem [#allocation1], 48
    %s147 = scalar_lea.vmem [#allocation0], 96
    %s148 = scalar_lea.vmem %s147, 7 [#allocation0]
    %v149 = vld [vmem:[%s148] ss:$-1 sm:$0xff]
    %v150 = vrot.slane %v149, 1
    %151 = vst [vmem:[%s146] sm:$0xff] %v150
    %s152 = scalar_lea.vmem %s147, 8 [#allocation0]
    %s153 = scalar_lea.vmem %s152, 7 [#allocation0]
    %v154 = vld [vmem:[%s153] ss:$-1 sm:$0xff]
    %v155 = vrot.slane %v154, 1
    %v156 = vlaneseq
    %v157 = vshrl.u32 %v156, 7
    %vm158 = vcmp.lt.s32.totalorder %v157, 7
    %159 = vst.msk [vmem:[%s146] sm:$0xff] %vm158, %v155
    %s160 = scalar_lea.vmem [#allocation1], 56
    %s161 = scalar_lea.vmem [#allocation0], 112
    %s162 = scalar_lea.vmem %s161, 7 [#allocation0]
    %v163 = vld [vmem:[%s162] ss:$-1 sm:$0xff]
    %v164 = vrot.slane %v163, 1
    %165 = vst [vmem:[%s160] sm:$0xff] %v164
    %s166 = scalar_lea.vmem %s161, 8 [#allocation0]
    %s167 = scalar_lea.vmem %s166, 7 [#allocation0]
    %v168 = vld [vmem:[%s167] ss:$-1 sm:$0xff]
    %v169 = vrot.slane %v168, 1
    %v170 = vlaneseq
    %v171 = vshrl.u32 %v170, 7
    %vm172 = vcmp.lt.s32.totalorder %v171, 7
    %173 = vst.msk [vmem:[%s160] sm:$0xff] %vm172, %v169
    // Predicated region
    $region36: #{reverse.0} parent=1 // pred_check
      _
    $region37: #{reverse.0} parent=1 // pred_check_branch
      %175 = sbr.rel (0) target = $region39
    $region38: #{reverse.0} parent=1 // pred_region
      // Predicated region
      $region40: #{reverse.0} parent=38 // pred_check
        _
      $region41: #{reverse.0} parent=38 // pred_check_branch
        %177 = sbr.rel (0) target = $region43
      $region42: #{reverse.0} parent=38 // pred_region
        // Predicated region
        $region55: #{reverse.0} parent=42 // pred_check
          _
        $region56: #{reverse.0} parent=42 // pred_check_branch
          %207 = sbr.rel (0) target = $region58
        $region57: #{reverse.0} parent=42 // pred_region
          loop: start=0, step=1, limit=1
          $region59: #{reverse.0} parent=57 // loop_pre_header
            _
          $region60: #{reverse.0} parent=57 // loop_header
            %s209 = sphi 0, %s213
            %p210 = scmp.ge.s32.totalorder %s209, 1
            %s214 = sphi [#allocation1], [#allocation1]
            %s215 = sphi %s1, %s1
          $region61: #{reverse.0} parent=57 // loop_header_branch
            %212 = sbr.rel (%p210) target = $region65
          $region62: #{reverse.0} parent=57 // loop_body
            %v216 = vld [vmem:[%s214] sm:$0xff]
            %217 = vst [vmem:[%s215] sm:$0xff] %v216
            %v218 = vld [vmem:[%s214 + $0x8] sm:$0xff]
            %219 = vst [vmem:[%s215 + $0x8] sm:$0xff] %v218
            %v220 = vld [vmem:[%s214 + $0x10] sm:$0xff]
            %221 = vst [vmem:[%s215 + $0x10] sm:$0xff] %v220
            %v222 = vld [vmem:[%s214 + $0x18] sm:$0xff]
            %223 = vst [vmem:[%s215 + $0x18] sm:$0xff] %v222
            %v224 = vld [vmem:[%s214 + $0x20] sm:$0xff]
            %225 = vst [vmem:[%s215 + $0x20] sm:$0xff] %v224
            %v226 = vld [vmem:[%s214 + $0x28] sm:$0xff]
            %227 = vst [vmem:[%s215 + $0x28] sm:$0xff] %v226
            %v228 = vld [vmem:[%s214 + $0x30] sm:$0xff]
            %229 = vst [vmem:[%s215 + $0x30] sm:$0xff] %v228
            %v230 = vld [vmem:[%s214 + $0x38] sm:$0xff]
            %231 = vst [vmem:[%s215 + $0x38] sm:$0xff] %v230
          $region63: #{reverse.0} parent=57 // loop_footer
            %s213 = sadd.s32 1, %s209
          $region64: #{reverse.0} parent=57 // loop_footer_branch
            %208 = sbr.rel target = $region60
          $region65: #{reverse.0} parent=57 // loop_exit
            _
        $region58: #{reverse.0} parent=42 // pred_fallthru
          _
        // Predicated region
        $region66: #{reverse.0} parent=42 // pred_check
          _
        $region67: #{reverse.0} parent=42 // pred_check_branch
          %233 = sbr.rel target = $region69
        $region68: #{reverse.0} parent=42 // pred_region
          _
        $region69: #{reverse.0} parent=42 // pred_fallthru
          _
      $region43: #{reverse.0} parent=38 // pred_fallthru
        _
      // Predicated region
      $region44: #{reverse.0} parent=38 // pred_check
        _
      $region45: #{reverse.0} parent=38 // pred_check_branch
        %179 = sbr.rel target = $region47
      $region46: #{reverse.0} parent=38 // pred_region
        %s181 = ssub.s32 256, 1
        loop: start=0, step=1, limit=1
        $region48: #{reverse.0} parent=46 // loop_pre_header
          _
        $region49: #{reverse.0} parent=46 // loop_header
          %s183 = sphi 0, %s187
          %p184 = scmp.ge.s32.totalorder %s183, 1
          %s188 = sphi [#allocation1], [#allocation1]
          %s189 = sphi %s1, %s1
        $region50: #{reverse.0} parent=46 // loop_header_branch
          %186 = sbr.rel (%p184) target = $region54
        $region51: #{reverse.0} parent=46 // loop_body
          %v190 = vld [vmem:[%s188] sm:%s181]
          %191 = vst [vmem:[%s189] sm:%s181] %v190
          %v192 = vld [vmem:[%s188 + $0x8] sm:%s181]
          %193 = vst [vmem:[%s189 + $0x8] sm:%s181] %v192
          %v194 = vld [vmem:[%s188 + $0x10] sm:%s181]
          %195 = vst [vmem:[%s189 + $0x10] sm:%s181] %v194
          %v196 = vld [vmem:[%s188 + $0x18] sm:%s181]
          %197 = vst [vmem:[%s189 + $0x18] sm:%s181] %v196
          %v198 = vld [vmem:[%s188 + $0x20] sm:%s181]
          %199 = vst [vmem:[%s189 + $0x20] sm:%s181] %v198
          %v200 = vld [vmem:[%s188 + $0x28] sm:%s181]
          %201 = vst [vmem:[%s189 + $0x28] sm:%s181] %v200
          %v202 = vld [vmem:[%s188 + $0x30] sm:%s181]
          %203 = vst [vmem:[%s189 + $0x30] sm:%s181] %v202
          %v204 = vld [vmem:[%s188 + $0x38] sm:%s181]
          %205 = vst [vmem:[%s189 + $0x38] sm:%s181] %v204
        $region52: #{reverse.0} parent=46 // loop_footer
          %s187 = sadd.s32 1, %s183
        $region53: #{reverse.0} parent=46 // loop_footer_branch
          %182 = sbr.rel target = $region49
        $region54: #{reverse.0} parent=46 // loop_exit
          _
      $region47: #{reverse.0} parent=38 // pred_fallthru
        _
    $region39: #{reverse.0} parent=1 // pred_fallthru
      _
    %234 = vnop

// kernel: spectral_conv2d_pallas.1
$region0: #{spectral_conv2d_pallas.1}
  #allocation0 [shape = 'u32[]', space=smem, size = 0x4, offset = 0x4, fixed_abs, tag = 'smem constant byte address 0x4 - core index']
  #allocation1 [shape = 'u32[72,128]{1,0:T(1,128)}', space=vmem, size = 0x9000, scoped, tag = 'internal scratch']
  %s0 = inlined_call_operand.vmem [shape: f32[8,2,2,128], index: 0, kind: input, shape index: {}]
  %s1 = inlined_call_operand.vmem [shape: f32[8,2,8,128], index: 1, kind: input, shape index: {}]
  %s2 = inlined_call_operand.vmem [shape: f32[2,2,8,128], index: 2, kind: output, shape index: {}]
  %s3 = sld [smem:[#allocation0]]
  $region18: #{spectral_conv2d_pallas.1} parent=0
    _
  %s5 = ssub.s32 1, %s3
  %s6 = scalar_select 0, %s5, %s3
  // Predicated region
  $region2: #{spectral_conv2d_pallas.1} parent=0 // pred_check
    _
  $region3: #{spectral_conv2d_pallas.1} parent=0 // pred_check_branch
    %8 = sbr.rel (0) target = $region5
  $region4: #{spectral_conv2d_pallas.1} parent=0 // pred_region
    _
  $region5: #{spectral_conv2d_pallas.1} parent=0 // pred_fallthru
    _
  // Predicated region
  $region6: #{spectral_conv2d_pallas.1} parent=0 // pred_check
    _
  $region7: #{spectral_conv2d_pallas.1} parent=0 // pred_check_branch
    %10 = sbr.rel (0) target = $region9
  $region8: #{spectral_conv2d_pallas.1} parent=0 // pred_region
    _
  $region9: #{spectral_conv2d_pallas.1} parent=0 // pred_fallthru
    _
  %v11 = vld [vmem:[%s0] sm:$0x3]
  %v12 = vld [vmem:[%s0 + $0x2] sm:$0x3]
  %v13 = vld [vmem:[%s1] sm:$0xff]
  %v14 = vld [vmem:[%s1 + $0x8] sm:$0xff]
  %v15 = vadd.f32 %v13, %v14
  %v16 = vsub.f32 %v14, %v13
  %v17 = vadd.f32 %v11, %v12
  %v19 = vrot.slane %v17, 1
  %v20 = vperm.slane %v17, 0
  %v21 = vperm.slane %v19, 0
  %v24 = vmul.f32 %v20, %v13
  %v25 = vmul.f32 %v21, %v13
  %v27 = vrot.slane %v12, 1
  %v28 = vperm.slane %v12, 0
  %v29 = vperm.slane %v27, 0
  %v32 = vmul.f32 %v28, %v15
  %v33 = vmul.f32 %v29, %v15
  %v34 = vsub.f32 %v24, %v32
  %v35 = vsub.f32 %v25, %v33
  %v36 = vadd.f32 %v34, 0.0
  %v37 = vadd.f32 %v35, 0.0
  %v39 = vrot.slane %v11, 1
  %v40 = vperm.slane %v11, 0
  %v41 = vperm.slane %v39, 0
  %v44 = vmul.f32 %v40, %v16
  %v45 = vmul.f32 %v41, %v16
  %v46 = vadd.f32 %v24, %v44
  %v47 = vadd.f32 %v25, %v45
  %v48 = vadd.f32 %v46, 0.0
  %v49 = vadd.f32 %v47, 0.0
  %s50 = scalar_lea.vmem %s0, 4
  %v51 = vld [vmem:[%s50] sm:$0x3]
  %v52 = vld [vmem:[%s50 + $0x2] sm:$0x3]
  %s53 = scalar_lea.vmem %s1, 16
  %v54 = vld [vmem:[%s53] sm:$0xff]
  %v55 = vld [vmem:[%s53 + $0x8] sm:$0xff]
  %v56 = vadd.f32 %v54, %v55
  %v57 = vsub.f32 %v55, %v54
  %v58 = vadd.f32 %v51, %v52
  %v60 = vrot.slane %v58, 1
  %v61 = vperm.slane %v58, 0
  %v62 = vperm.slane %v60, 0
  %v65 = vmul.f32 %v61, %v54
  %v66 = vmul.f32 %v62, %v54
  %v68 = vrot.slane %v52, 1
  %v69 = vperm.slane %v52, 0
  %v70 = vperm.slane %v68, 0
  %v73 = vmul.f32 %v69, %v56
  %v74 = vmul.f32 %v70, %v56
  %v75 = vsub.f32 %v65, %v73
  %v76 = vsub.f32 %v66, %v74
  %v77 = vadd.f32 %v36, %v75
  %v78 = vadd.f32 %v37, %v76
  %v80 = vrot.slane %v51, 1
  %v81 = vperm.slane %v51, 0
  %v82 = vperm.slane %v80, 0
  %v85 = vmul.f32 %v81, %v57
  %v86 = vmul.f32 %v82, %v57
  %v87 = vadd.f32 %v65, %v85
  %v88 = vadd.f32 %v66, %v86
  %v89 = vadd.f32 %v48, %v87
  %v90 = vadd.f32 %v49, %v88
  %s91 = scalar_lea.vmem %s0, 8
  %v92 = vld [vmem:[%s91] sm:$0x3]
  %v93 = vld [vmem:[%s91 + $0x2] sm:$0x3]
  %s94 = scalar_lea.vmem %s1, 32
  %v95 = vld [vmem:[%s94] sm:$0xff]
  %v96 = vld [vmem:[%s94 + $0x8] sm:$0xff]
  %v97 = vadd.f32 %v95, %v96
  %v98 = vsub.f32 %v96, %v95
  %v99 = vadd.f32 %v92, %v93
  %v101 = vrot.slane %v99, 1
  %v102 = vperm.slane %v99, 0
  %v103 = vperm.slane %v101, 0
  %v106 = vmul.f32 %v102, %v95
  %v107 = vmul.f32 %v103, %v95
  %v109 = vrot.slane %v93, 1
  %v110 = vperm.slane %v93, 0
  %v111 = vperm.slane %v109, 0
  %v114 = vmul.f32 %v110, %v97
  %v115 = vmul.f32 %v111, %v97
  %v116 = vsub.f32 %v106, %v114
  %v117 = vsub.f32 %v107, %v115
  %v118 = vadd.f32 %v77, %v116
  %v119 = vadd.f32 %v78, %v117
  %v121 = vrot.slane %v92, 1
  %v122 = vperm.slane %v92, 0
  %v123 = vperm.slane %v121, 0
  %v126 = vmul.f32 %v122, %v98
  %v127 = vmul.f32 %v123, %v98
  %v128 = vadd.f32 %v106, %v126
  %v129 = vadd.f32 %v107, %v127
  %v130 = vadd.f32 %v89, %v128
  %v131 = vadd.f32 %v90, %v129
  %s132 = scalar_lea.vmem %s0, 12
  %v133 = vld [vmem:[%s132] sm:$0x3]
  %v134 = vld [vmem:[%s132 + $0x2] sm:$0x3]
  %s135 = scalar_lea.vmem %s1, 48
  %v136 = vld [vmem:[%s135] sm:$0xff]
  %v137 = vld [vmem:[%s135 + $0x8] sm:$0xff]
  %v138 = vadd.f32 %v136, %v137
  %v139 = vsub.f32 %v137, %v136
  %v140 = vadd.f32 %v133, %v134
  %v142 = vrot.slane %v140, 1
  %v143 = vperm.slane %v140, 0
  %v144 = vperm.slane %v142, 0
  %v147 = vmul.f32 %v143, %v136
  %v148 = vmul.f32 %v144, %v136
  %v150 = vrot.slane %v134, 1
  %v151 = vperm.slane %v134, 0
  %v152 = vperm.slane %v150, 0
  %v155 = vmul.f32 %v151, %v138
  %v156 = vmul.f32 %v152, %v138
  %v157 = vsub.f32 %v147, %v155
  %v158 = vsub.f32 %v148, %v156
  %v159 = vadd.f32 %v118, %v157
  %v160 = vadd.f32 %v119, %v158
  %v162 = vrot.slane %v133, 1
  %v163 = vperm.slane %v133, 0
  %v164 = vperm.slane %v162, 0
  %v167 = vmul.f32 %v163, %v139
  %v168 = vmul.f32 %v164, %v139
  %v169 = vadd.f32 %v147, %v167
  %v170 = vadd.f32 %v148, %v168
  %v171 = vadd.f32 %v130, %v169
  %v172 = vadd.f32 %v131, %v170
  %s173 = scalar_lea.vmem %s0, 16
  %v174 = vld [vmem:[%s173] sm:$0x3]
  %v175 = vld [vmem:[%s173 + $0x2] sm:$0x3]
  %s176 = scalar_lea.vmem %s1, 64
  %v177 = vld [vmem:[%s176] sm:$0xff]
  %v178 = vld [vmem:[%s176 + $0x8] sm:$0xff]
  %v179 = vadd.f32 %v177, %v178
  %v180 = vsub.f32 %v178, %v177
  %v181 = vadd.f32 %v174, %v175
  %v183 = vrot.slane %v181, 1
  %v184 = vperm.slane %v181, 0
  %v185 = vperm.slane %v183, 0
  %v188 = vmul.f32 %v184, %v177
  %v189 = vmul.f32 %v185, %v177
  %v191 = vrot.slane %v175, 1
  %v192 = vperm.slane %v175, 0
  %v193 = vperm.slane %v191, 0
  %v196 = vmul.f32 %v192, %v179
  %v197 = vmul.f32 %v193, %v179
  %v198 = vsub.f32 %v188, %v196
  %v199 = vsub.f32 %v189, %v197
  %v200 = vadd.f32 %v159, %v198
  %v201 = vadd.f32 %v160, %v199
  %v203 = vrot.slane %v174, 1
  %v204 = vperm.slane %v174, 0
  %v205 = vperm.slane %v203, 0
  %v208 = vmul.f32 %v204, %v180
  %v209 = vmul.f32 %v205, %v180
  %v210 = vadd.f32 %v188, %v208
  %v211 = vadd.f32 %v189, %v209
  %v212 = vadd.f32 %v171, %v210
  %v213 = vadd.f32 %v172, %v211
  %s214 = scalar_lea.vmem %s0, 20
  %v215 = vld [vmem:[%s214] sm:$0x3]
  %v216 = vld [vmem:[%s214 + $0x2] sm:$0x3]
  %s217 = scalar_lea.vmem %s1, 80
  %v218 = vld [vmem:[%s217] sm:$0xff]
  %v219 = vld [vmem:[%s217 + $0x8] sm:$0xff]
  %v220 = vadd.f32 %v218, %v219
  %v221 = vsub.f32 %v219, %v218
  %v222 = vadd.f32 %v215, %v216
  %v224 = vrot.slane %v222, 1
  %v225 = vperm.slane %v222, 0
  %v226 = vperm.slane %v224, 0
  %v229 = vmul.f32 %v225, %v218
  %v230 = vmul.f32 %v226, %v218
  %v232 = vrot.slane %v216, 1
  %v233 = vperm.slane %v216, 0
  %v234 = vperm.slane %v232, 0
  %v237 = vmul.f32 %v233, %v220
  %v238 = vmul.f32 %v234, %v220
  %v239 = vsub.f32 %v229, %v237
  %v240 = vsub.f32 %v230, %v238
  %v241 = vadd.f32 %v200, %v239
  %v242 = vadd.f32 %v201, %v240
  %v244 = vrot.slane %v215, 1
  %v245 = vperm.slane %v215, 0
  %v246 = vperm.slane %v244, 0
  %v249 = vmul.f32 %v245, %v221
  %v250 = vmul.f32 %v246, %v221
  %v251 = vadd.f32 %v229, %v249
  %v252 = vadd.f32 %v230, %v250
  %v253 = vadd.f32 %v212, %v251
  %v254 = vadd.f32 %v213, %v252
  %s255 = scalar_lea.vmem %s0, 24
  %v256 = vld [vmem:[%s255] sm:$0x3]
  %v257 = vld [vmem:[%s255 + $0x2] sm:$0x3]
  %s258 = scalar_lea.vmem %s1, 96
  %v259 = vld [vmem:[%s258] sm:$0xff]
  %v260 = vld [vmem:[%s258 + $0x8] sm:$0xff]
  %v261 = vadd.f32 %v259, %v260
  %v262 = vsub.f32 %v260, %v259
  %v263 = vadd.f32 %v256, %v257
  %v265 = vrot.slane %v263, 1
  %v266 = vperm.slane %v263, 0
  %v267 = vperm.slane %v265, 0
  %v270 = vmul.f32 %v266, %v259
  %v271 = vmul.f32 %v267, %v259
  %v273 = vrot.slane %v257, 1
  %v274 = vperm.slane %v257, 0
  %v275 = vperm.slane %v273, 0
  %v278 = vmul.f32 %v274, %v261
  %v279 = vmul.f32 %v275, %v261
  %v280 = vsub.f32 %v270, %v278
  %v281 = vsub.f32 %v271, %v279
  %v282 = vadd.f32 %v241, %v280
  %v283 = vadd.f32 %v242, %v281
  %v285 = vrot.slane %v256, 1
  %v286 = vperm.slane %v256, 0
  %v287 = vperm.slane %v285, 0
  %v290 = vmul.f32 %v286, %v262
  %v291 = vmul.f32 %v287, %v262
  %v292 = vadd.f32 %v270, %v290
  %v293 = vadd.f32 %v271, %v291
  %v294 = vadd.f32 %v253, %v292
  %v295 = vadd.f32 %v254, %v293
  %s296 = scalar_lea.vmem %s0, 28
  %v297 = vld [vmem:[%s296] sm:$0x3]
  %v298 = vld [vmem:[%s296 + $0x2] sm:$0x3]
  %s299 = scalar_lea.vmem %s1, 112
  %v300 = vld [vmem:[%s299] sm:$0xff]
  %v301 = vld [vmem:[%s299 + $0x8] sm:$0xff]
  %v302 = vadd.f32 %v300, %v301
  %v303 = vsub.f32 %v301, %v300
  %v304 = vadd.f32 %v297, %v298
  %v306 = vrot.slane %v304, 1
  %v307 = vperm.slane %v304, 0
  %v308 = vperm.slane %v306, 0
  %v311 = vmul.f32 %v307, %v300
  %v312 = vmul.f32 %v308, %v300
  %v314 = vrot.slane %v298, 1
  %v315 = vperm.slane %v298, 0
  %v316 = vperm.slane %v314, 0
  %v319 = vmul.f32 %v315, %v302
  %v320 = vmul.f32 %v316, %v302
  %v321 = vsub.f32 %v311, %v319
  %v322 = vsub.f32 %v312, %v320
  %v323 = vadd.f32 %v282, %v321
  %v324 = vadd.f32 %v283, %v322
  %v326 = vrot.slane %v297, 1
  %v327 = vperm.slane %v297, 0
  %v328 = vperm.slane %v326, 0
  %v331 = vmul.f32 %v327, %v303
  %v332 = vmul.f32 %v328, %v303
  %v333 = vadd.f32 %v311, %v331
  %v334 = vadd.f32 %v312, %v332
  %v335 = vadd.f32 %v294, %v333
  %v336 = vadd.f32 %v295, %v334
  %337 = vst [vmem:[%s2] sm:$0xff] %v323
  %338 = vst [vmem:[%s2 + $0x8] sm:$0xff] %v324
  %s339 = scalar_lea.vmem %s2, 16
  %340 = vst [vmem:[%s339] sm:$0xff] %v335
  %341 = vst [vmem:[%s339 + $0x8] sm:$0xff] %v336
  // Predicated region
  $region10: #{spectral_conv2d_pallas.1} parent=0 // pred_check
    _
  $region11: #{spectral_conv2d_pallas.1} parent=0 // pred_check_branch
    %343 = sbr.rel (0) target = $region13
  $region12: #{spectral_conv2d_pallas.1} parent=0 // pred_region
    _
  $region13: #{spectral_conv2d_pallas.1} parent=0 // pred_fallthru
    _
  // Predicated region
  $region14: #{spectral_conv2d_pallas.1} parent=0 // pred_check
    _
  $region15: #{spectral_conv2d_pallas.1} parent=0 // pred_check_branch
    %345 = sbr.rel (0) target = $region17
  $region16: #{spectral_conv2d_pallas.1} parent=0 // pred_region
    _
  $region17: #{spectral_conv2d_pallas.1} parent=0 // pred_fallthru
    _

</llo_original>
